<compile_context>
chip_gen: v7x
topology: tpu7x:2x2x1
jax: 0.10.0
libtpu: 0.0.40
codegen_flags: <defaults>
</compile_context>

<pallas_src>
import jax
import jax.numpy as jnp
from jax.experimental import pallas as pl
from jax.experimental.pallas import tpu as pltpu


def _round_up(x, m):
    return ((x + m - 1) // m) * m


def _sublane(dtype):
    # rows per vreg sublane tile: f32 -> 8, bf16 -> 16, fp8/int8 -> 32
    return {4: 8, 2: 16, 1: 32}[jnp.dtype(dtype).itemsize]


def _vmem_capacity_bytes():
    try:
        return int(pltpu.get_tpu_info().vmem_capacity_bytes)
    except Exception:
        return 64 * 1024 * 1024          # conservative fallback (v7x per-TC)


def _cores_per_chip():
    try:
        d = jax.devices()[0]
        for attr in ("num_cores", "core_count", "cores_per_chip"):
            v = getattr(d, attr, None)
            if isinstance(v, int) and v > 0:
                return v
    except Exception:
        pass
    return 1


def _pick_tile(full, cands):
    """Pick a tile from `cands` minimizing padded extent; tie-break larger."""
    best = None
    for c in cands:
        pad = _round_up(full, c)
        if best is None or pad < best[0] or (pad == best[0] and c > best[1]):
            best = (pad, c)
    return best[1]


def _linear_kernel_direct(x_ref, w_ref, b_ref, o_ref):
    """f32 output: accumulate straight into the k-invariant output block."""
    k = pl.program_id(2)

    @pl.when(k == 0)
    def _():
        # Fold the bias into the accumulator init (added exactly once).
        o_ref[...] = jnp.broadcast_to(b_ref[...], o_ref.shape)

    o_ref[...] += jnp.dot(x_ref[...], w_ref[...],
                          preferred_element_type=jnp.float32)


def _linear_kernel_scratch(x_ref, w_ref, b_ref, o_ref, acc_ref):
    """Non-f32 output: accumulate in an f32 scratch, cast on the last K step."""
    k = pl.program_id(2)

    @pl.when(k == 0)
    def _():
        acc_ref[...] = jnp.broadcast_to(b_ref[...], acc_ref.shape)

    acc_ref[...] += jnp.dot(x_ref[...], w_ref[...],
                            preferred_element_type=jnp.float32)

    @pl.when(k == pl.num_programs(2) - 1)
    def _():
        o_ref[...] = acc_ref[...].astype(o_ref.dtype)


class PallasLinear:
    """PyTorch nn.Linear forward (y = x @ W^T + b) with weights packed once."""

    def __init__(self, weight, bias, *, compute_dtype=None):
        # weight: (out_dim, in_dim)  (torch.nn.Linear layout); bias: (out_dim,)
        out_dim, in_dim = weight.shape
        self.in_dim, self.out_dim = in_dim, out_dim
        self.compute_dtype = (jnp.dtype(compute_dtype) if compute_dtype is not None
                              else jnp.dtype(weight.dtype))

        vmem_cap = _vmem_capacity_bytes()
        # Scoped VMEM limit with headroom below the physical capacity:
        #  v5e/v6e (128 MiB) -> 96 MiB, v7x (64 MiB) -> 48 MiB.
        self.vmem_limit = max(min(vmem_cap - 16 * 1024 * 1024, 96 * 1024 * 1024),
                              32 * 1024 * 1024)
        self.budget = int(self.vmem_limit * 0.85)
        self.cores = _cores_per_chip()

        np_full = _round_up(out_dim, 128)    # lane-dense output
        kp_full = _round_up(in_dim, 128)

        # N tile: prefer 256 multiples (2x256x256 MXU on v6e/v7x).
        if np_full <= 512:
            tn = np_full
        else:
            tn = _pick_tile(np_full, (512, 256, 384, 128))
        # K tile: single reduction step when it fits, else a big 256 multiple.
        if kp_full <= 2048:
            tk = kp_full
        else:
            tk = _pick_tile(kp_full, (2048, 1792, 1536, 1280, 1024, 768, 512))

        # Shrink (tk first, then tn) until a nominal tm=256 tile set fits VMEM.
        xb = jnp.dtype(self.compute_dtype).itemsize
        while self._footprint(256, tn, tk, xb, xb, 4, scratch=True) > self.budget:
            if tk > 512:
                tk = max(512, tk // 2)
            elif tn > 128:
                tn = max(128, tn // 2)
            else:
                break
        self.tn, self.tk = tn, tk
        self.Np = _round_up(np_full, tn)
        self.Kp = _round_up(kp_full, tk)

        # ---- one-time weight / bias packing (transpose + cast + pad) --------
        w_t = jnp.asarray(weight).T.astype(self.compute_dtype)       # (in, out)
        if (self.Kp, self.Np) != (in_dim, out_dim):
            w_t = jnp.pad(w_t, ((0, self.Kp - in_dim), (0, self.Np - out_dim)))
        self.w_packed = jax.block_until_ready(w_t)

        b = jnp.reshape(jnp.asarray(bias), (1, out_dim)).astype(jnp.float32)
        if self.Np != out_dim:
            b = jnp.pad(b, ((0, 0), (0, self.Np - out_dim)))
        self.b_packed = jax.block_until_ready(b)

    @staticmethod
    def _footprint(tm, tn, tk, xb, wb, ob, scratch):
        # double-buffered x / W / bias / output tiles + optional f32 accumulator
        f = 2 * (tm * tk * xb + tk * tn * wb + tn * 4) + 2 * tm * tn * ob
        if scratch:
            f += tm * tn * 4
        return f

    def __call__(self, x):
        B, d_in = x.shape
        assert d_in == self.in_dim
        out_dtype = x.dtype

        if x.dtype != self.compute_dtype:
            x = x.astype(self.compute_dtype)

        xb = jnp.dtype(self.compute_dtype).itemsize
        ob = jnp.dtype(out_dtype).itemsize
        use_scratch = out_dtype != jnp.float32
        sub = _sublane(self.compute_dtype)
        tn, tk = self.tn, self.tk

        # Largest tm the VMEM budget allows with these (tn, tk).
        fixed = 2 * (tk * tn * xb + tn * 4)
        per_m = 2 * tk * xb + 2 * tn * ob + (tn * 4 if use_scratch else 0)
        tm_cap = max(sub, (self.budget - fixed) // per_m)
        tm_cap = (min(tm_cap, 2048) // sub) * sub

        b_aligned = _round_up(B, sub)
        if b_aligned <= tm_cap:
            tm = b_aligned                 # one M tile: weight streamed once
        else:
            cands = [c for c in (2048, 1536, 1024, 768, 512, 384, 256, 128)
                     if c <= tm_cap and c % sub == 0]
            tm = _pick_tile(B, cands) if cands else tm_cap
        Mp = _round_up(B, tm)

        # v7x megacore: ensure >= 2 blocks along a "parallel" axis.
        if self.cores >= 2 and (Mp // tm) * (self.Np // tn) == 1:
            if tn >= 256 and tn % 256 == 0:
                tn //= 2
            elif b_aligned >= 2 * sub:
                tm = _round_up((B + 1) // 2, sub)
                Mp = _round_up(B, tm)

        # Pad activations only when actually needed.
        if (Mp, self.Kp) != (B, d_in):
            x = jnp.pad(x, ((0, Mp - B), (0, self.Kp - d_in)))

        grid = (Mp // tm, self.Np // tn, self.Kp // tk)   # K (reduction) last

        kernel = _linear_kernel_scratch if use_scratch else _linear_kernel_direct
        scratch_shapes = ([pltpu.VMEM((tm, tn), jnp.float32)]
                          if use_scratch else [])

        bytes_accessed = (Mp * self.Kp * xb + self.Kp * self.Np * xb
                          + self.Np * 4 + Mp * self.Np * ob)

        out_padded = pl.pallas_call(
            kernel,
            out_shape=jax.ShapeDtypeStruct((Mp, self.Np), out_dtype),
            grid=grid,
            in_specs=[
                pl.BlockSpec((tm, tk), lambda i, j, k: (i, k)),   # x tile
                pl.BlockSpec((tk, tn), lambda i, j, k: (k, j)),   # W tile
                pl.BlockSpec((1, tn), lambda i, j, k: (0, j)),    # bias strip
            ],
            # Output block is k-invariant -> VMEM-resident across the reduction.
            out_specs=pl.BlockSpec((tm, tn), lambda i, j, k: (i, j)),
            scratch_shapes=scratch_shapes,
            compiler_params=pltpu.CompilerParams(
                dimension_semantics=("parallel", "parallel", "arbitrary"),
                vmem_limit_bytes=self.vmem_limit,
            ),
            cost_estimate=pl.CostEstimate(
                flops=2 * Mp * self.Np * self.Kp,
                transcendentals=0,
                bytes_accessed=bytes_accessed,
            ),
        )(x, self.w_packed, self.b_packed)

        if (Mp, self.Np) != (B, self.out_dim):
            out_padded = out_padded[:B, :self.out_dim]
        return out_padded


if __name__ == "__main__":
    # Small shapes consistent with nn.Linear(input_dim, output_dim).
    batch, input_dim, output_dim = 8, 32, 16

    key = jax.random.PRNGKey(0)
    k_x, k_w, k_b = jax.random.split(key, 3)

    # PyTorch-style init: weight is (out, in), uniform bound 1/sqrt(fan_in).
    bound = 1.0 / jnp.sqrt(jnp.float32(input_dim))
    weight = jax.random.uniform(k_w, (output_dim, input_dim), jnp.float32,
                                minval=-bound, maxval=bound)
    bias = jax.random.uniform(k_b, (output_dim,), jnp.float32,
                              minval=-bound, maxval=bound)
    x = jax.random.normal(k_x, (batch, input_dim), jnp.float32)

    y_ref = x @ weight.T + bias[None, :]

    # f32 path: exact nn.Linear forward semantics, strict tolerance.
    fc = PallasLinear(weight, bias)
    y = fc(x)
    jax.block_until_ready(y)
    assert y.shape == (batch, output_dim)
    assert jnp.allclose(y, y_ref, atol=1e-5, rtol=1e-5)

    # bf16 MXU fast path (weight pre-cast/pre-padded once at construction),
    # f32 accumulation: loose tolerance.  (fp8 on v7x via compute_dtype too.)
    fc_bf16 = PallasLinear(weight, bias, compute_dtype=jnp.bfloat16)
    y_bf16 = fc_bf16(x)
    jax.block_until_ready(y_bf16)
    assert y_bf16.shape == (batch, output_dim)
    assert jnp.allclose(y_bf16, y_ref, atol=5e-2, rtol=5e-2)

    print("KERNEL_OK")
</pallas_src>

<mosaic_0001>
module attributes {stable_mosaic.version = 11 : i64} {
  func.func @_linear_kernel_direct(%arg0: i32, %arg1: i32, %arg2: i32, %arg3: memref<8x128xf32, #tpu.memory_space<vmem>>, %arg4: memref<128x128xf32, #tpu.memory_space<vmem>>, %arg5: memref<1x128xf32, #tpu.memory_space<vmem>>, %arg6: memref<8x128xf32, #tpu.memory_space<vmem>>) attributes {dimension_semantics = [#tpu.dimension_semantics<parallel>, #tpu.dimension_semantics<parallel>, #tpu.dimension_semantics<arbitrary>], iteration_bounds = array<i64: 1, 1, 1>, scalar_prefetch = 0 : i64, scratch_operands = 0 : i64, tpu.core_type = #tpu.core_type<tc>, window_params = [{transform_indices = @transform_0, window_bounds = array<i64: 8, 128>}, {transform_indices = @transform_1, window_bounds = array<i64: 128, 128>}, {transform_indices = @transform_2, window_bounds = array<i64: 1, 128>}, {transform_indices = @transform_3, window_bounds = array<i64: 8, 128>}]} {
    %c0_i32 = arith.constant 0 : i32
    %0 = arith.cmpi eq, %arg2, %c0_i32 : i32
    %1 = arith.extui %0 : i1 to i32
    %c0_i32_0 = arith.constant 0 : i32
    %2 = arith.cmpi ne, %1, %c0_i32_0 : i32
    scf.if %2 {
      %c0_8 = arith.constant 0 : index
      %c0_9 = arith.constant 0 : index
      %9 = vector.load %arg5[%c0_8, %c0_9] : memref<1x128xf32, #tpu.memory_space<vmem>>, vector<1x128xf32>
      %10 = vector.shape_cast %9 : vector<1x128xf32> to vector<1x128xf32>
      %11 = vector.broadcast %10 : vector<1x128xf32> to vector<8x128xf32>
      %c0_10 = arith.constant 0 : index
      %c0_11 = arith.constant 0 : index
      %12 = vector.load %arg6[%c0_10, %c0_11] : memref<8x128xf32, #tpu.memory_space<vmem>>, vector<8x128xf32>
      tpu.vector_store %arg6[%c0_10, %c0_11], %11 {strides = array<i32>} : memref<8x128xf32, #tpu.memory_space<vmem>>, vector<8x128xf32>,
    } else {
    }
    %c0 = arith.constant 0 : index
    %c0_1 = arith.constant 0 : index
    %3 = vector.load %arg6[%c0, %c0_1] : memref<8x128xf32, #tpu.memory_space<vmem>>, vector<8x128xf32>
    %c0_2 = arith.constant 0 : index
    %c0_3 = arith.constant 0 : index
    %4 = vector.load %arg3[%c0_2, %c0_3] : memref<8x128xf32, #tpu.memory_space<vmem>>, vector<8x128xf32>
    %c0_4 = arith.constant 0 : index
    %c0_5 = arith.constant 0 : index
    %5 = vector.load %arg4[%c0_4, %c0_5] : memref<128x128xf32, #tpu.memory_space<vmem>>, vector<128x128xf32>
    %cst = arith.constant dense<0.000000e+00> : vector<8x128xf32>
    %6 = tpu.matmul %4, %5, %cst {dimension_numbers = #tpu.dot_dimension_numbers<[1], [0], [0], [1], [0, 0, 1, 1], [], []>} : vector<8x128xf32>, vector<128x128xf32>, vector<8x128xf32> -> vector<8x128xf32>
    %7 = arith.addf %3, %6 : vector<8x128xf32>
    %c0_6 = arith.constant 0 : index
    %c0_7 = arith.constant 0 : index
    %8 = vector.load %arg6[%c0_6, %c0_7] : memref<8x128xf32, #tpu.memory_space<vmem>>, vector<8x128xf32>
    tpu.vector_store %arg6[%c0_6, %c0_7], %7 {strides = array<i32>} : memref<8x128xf32, #tpu.memory_space<vmem>>, vector<8x128xf32>,
    return
  }
  func.func @transform_0(%arg0: i32, %arg1: i32, %arg2: i32) -> (i32, i32) {
    %c0_i32 = arith.constant 0 : i32
    return %arg0, %arg2 : i32, i32
  }
  func.func @transform_1(%arg0: i32, %arg1: i32, %arg2: i32) -> (i32, i32) {
    %c0_i32 = arith.constant 0 : i32
    return %arg2, %arg1 : i32, i32
  }
  func.func @transform_2(%arg0: i32, %arg1: i32, %arg2: i32) -> (i32, i32) {
    %c0_i32 = arith.constant 0 : i32
    %c0_i32_0 = arith.constant 0 : i32
    return %c0_i32, %arg1 : i32, i32
  }
  func.func @transform_3(%arg0: i32, %arg1: i32, %arg2: i32) -> (i32, i32) {
    %c0_i32 = arith.constant 0 : i32
    return %arg0, %arg1 : i32, i32
  }
}

</mosaic_0001>

<llo_original>
// kernel: tpu_custom_call.1
$region0: #{tpu_custom_call.1}
  #allocation0 [shape = 'u32[]', space=smem, size = 0x4, offset = 0x4, fixed_abs, tag = 'smem constant byte address 0x4 - core index']
  #allocation1 [shape = 'u32[144,128]{1,0:T(1,128)}', space=vmem, size = 0x12000, scoped, tag = 'internal scratch']
  %s0 = inlined_call_operand.hbm [shape: f32[8,128], index: 0, kind: input, shape index: {}]
  %s1 = inlined_call_operand.hbm [shape: f32[128,128], index: 1, kind: input, shape index: {}]
  %s2 = inlined_call_operand.vmem [shape: f32[1,128], index: 2, kind: input, shape index: {}]
  %s3 = inlined_call_operand.hbm [shape: f32[8,128], index: 3, kind: output, shape index: {}]
  %s4 = sld [smem:[#allocation0]]
  $region34: #{tpu_custom_call.1} parent=0
    _
  %s6 = ssub.s32 1, %s4
  %s7 = scalar_select 0, %s6, %s4
  $region1: #{tpu_custom_call.1} parent=0
    #allocation2 [shape = 'u8[4096]{0}', space=vmem, size = 0x1000, scoped, tag = 'input window, operand 0, single buffered']
    #allocation3 [shape = 's32[1]{0}', space=sflag, size = 0x4, scoped, tag = 'scoped memory for tpu_custom_call.1']
    #allocation4 [shape = 's32[1]{0}', space=sflag, size = 0x4, scoped, tag = 'scoped memory for tpu_custom_call.1']
    #allocation5 [shape = 'u8[65536]{0}', space=vmem, size = 0x10000, scoped, tag = 'input window, operand 1, single buffered']
    #allocation6 [shape = 's32[1]{0}', space=sflag, size = 0x4, scoped, tag = 'scoped memory for tpu_custom_call.1']
    #allocation7 [shape = 'u8[4096]{0}', space=vmem, size = 0x1000, scoped, tag = 'output window, operand 0, single buffered']
    %8 = vsyncpa [#allocation3], 0
    %9 = vsyncpa [#allocation6], 0
    %10 = vsyncpa [#allocation4], 0
    // Predicated region
    $region2: #{tpu_custom_call.1} parent=1 // pred_check
      _
    $region3: #{tpu_custom_call.1} parent=1 // pred_check_branch
      %12 = sbr.rel (0) target = $region5
    $region4: #{tpu_custom_call.1} parent=1 // pred_region
      %s14 = ssub.s32 128, 128
      %15 = vsyncadd [#allocation3], %s14
      %s17 = sshll.u32 [#allocation2], 4
      %s18 = int_to_ptr.vmem [resolvable:$true] %s17
      %20 = dma.hbm_to_vmem [thread:$0]  %s0, 128, %s18, [#allocation3]
    $region5: #{tpu_custom_call.1} parent=1 // pred_fallthru
      _
    // Predicated region
    $region6: #{tpu_custom_call.1} parent=1 // pred_check
      _
    $region7: #{tpu_custom_call.1} parent=1 // pred_check_branch
      %22 = sbr.rel (0) target = $region9
    $region8: #{tpu_custom_call.1} parent=1 // pred_region
      %s24 = ssub.s32 2048, 2048
      %25 = vsyncadd [#allocation6], %s24
      %s26 = sshll.u32 [#allocation5], 4
      %s27 = int_to_ptr.vmem [resolvable:$true] %s26
      %32 = dma.hbm_to_vmem [thread:$0]  %s1, 2048, %s27, [#allocation6], 128, 128, 8
    $region9: #{tpu_custom_call.1} parent=1 // pred_fallthru
      _
    // Predicated region
    $region10: #{tpu_custom_call.1} parent=1 // pred_check
      _
    $region11: #{tpu_custom_call.1} parent=1 // pred_check_branch
      %34 = sbr.rel (0) target = $region13
    $region12: #{tpu_custom_call.1} parent=1 // pred_region
      _
    $region13: #{tpu_custom_call.1} parent=1 // pred_fallthru
      _
    // Predicated region
    $region14: #{tpu_custom_call.1} parent=1 // pred_check
      _
    $region15: #{tpu_custom_call.1} parent=1 // pred_check_branch
      %36 = sbr.rel (0) target = $region17
    $region16: #{tpu_custom_call.1} parent=1 // pred_region
      %37 = dma.done [#allocation3], 128
    $region17: #{tpu_custom_call.1} parent=1 // pred_fallthru
      _
    // Predicated region
    $region18: #{tpu_custom_call.1} parent=1 // pred_check
      _
    $region19: #{tpu_custom_call.1} parent=1 // pred_check_branch
      %39 = sbr.rel (0) target = $region21
    $region20: #{tpu_custom_call.1} parent=1 // pred_region
      %40 = dma.done [#allocation6], 2048
    $region21: #{tpu_custom_call.1} parent=1 // pred_fallthru
      _
    %p41 = scmp.eq.s32.totalorder 0, 0
    // Predicated region
    $region22: #{tpu_custom_call.1} parent=1 // pred_check
      %p42 = pneg %p41
    $region23: #{tpu_custom_call.1} parent=1 // pred_check_branch
      %44 = sbr.rel (%p42) target = $region25
    $region24: #{tpu_custom_call.1} parent=1 // pred_region
      %v45 = vld [vmem:[%s2] sm:$0x1]
      %v47 = vlaneseq
      %v48 = vshrl.u32 %v47, 7
      %v49 = vsub.s32 0, %v48
      %v50 = vrot.slane %v45, %v49
      %52 = vst [vmem:[#allocation7] sm:$0xff] %v50
    $region25: #{tpu_custom_call.1} parent=1 // pred_fallthru
      _
    %v53 = vld [vmem:[#allocation7] sm:$0xff]
    %v54 = vld [vmem:[#allocation2] sm:$0xff]
    %v55 = vld [vmem:[#allocation5] sm:$0xff]
    %v56 = vld [vmem:[#allocation5 + $0x8] sm:$0xff]
    %v57 = vld [vmem:[#allocation5 + $0x10] sm:$0xff]
    %v58 = vld [vmem:[#allocation5 + $0x18] sm:$0xff]
    %v59 = vld [vmem:[#allocation5 + $0x20] sm:$0xff]
    %v60 = vld [vmem:[#allocation5 + $0x28] sm:$0xff]
    %v61 = vld [vmem:[#allocation5 + $0x30] sm:$0xff]
    %v62 = vld [vmem:[#allocation5 + $0x38] sm:$0xff]
    %v63 = vld [vmem:[#allocation5 + $0x40] sm:$0xff]
    %v64 = vld [vmem:[#allocation5 + $0x48] sm:$0xff]
    %v65 = vld [vmem:[#allocation5 + $0x50] sm:$0xff]
    %v66 = vld [vmem:[#allocation5 + $0x58] sm:$0xff]
    %v67 = vld [vmem:[#allocation5 + $0x60] sm:$0xff]
    %v68 = vld [vmem:[#allocation5 + $0x68] sm:$0xff]
    %v69 = vld [vmem:[#allocation5 + $0x70] sm:$0xff]
    %v70 = vld [vmem:[#allocation5 + $0x78] sm:$0xff]
    %71 = vmatprep.subr.mxu0 0.0
    %72 = vmatpush1.msra.mxu0 %v55
    %73 = vmatprep.subr.mxu0 0.0
    %74 = vmatpush1.msra.mxu0 %v56
    %75 = vmatprep.subr.mxu0 0.0
    %76 = vmatpush1.msra.mxu0 %v57
    %77 = vmatprep.subr.mxu0 0.0
    %78 = vmatpush1.msra.mxu0 %v58
    %79 = vmatprep.subr.mxu0 0.0
    %80 = vmatpush1.msra.mxu0 %v59
    %81 = vmatprep.subr.mxu0 0.0
    %82 = vmatpush1.msra.mxu0 %v60
    %83 = vmatprep.subr.mxu0 0.0
    %84 = vmatpush1.msra.mxu0 %v61
    %85 = vmatprep.subr.mxu0 0.0
    %86 = vmatpush1.msra.mxu0 %v62
    %87 = vmatprep.subr.mxu0 0.0
    %88 = vmatpush1.msra.mxu0 %v63
    %89 = vmatprep.subr.mxu0 0.0
    %90 = vmatpush1.msra.mxu0 %v64
    %91 = vmatprep.subr.mxu0 0.0
    %92 = vmatpush1.msra.mxu0 %v65
    %93 = vmatprep.subr.mxu0 0.0
    %94 = vmatpush1.msra.mxu0 %v66
    %95 = vmatprep.subr.mxu0 0.0
    %96 = vmatpush1.msra.mxu0 %v67
    %97 = vmatprep.subr.mxu0 0.0
    %98 = vmatpush1.msra.mxu0 %v68
    %99 = vmatprep.subr.mxu0 0.0
    %100 = vmatpush1.msra.mxu0 %v69
    %101 = vmatprep.subr.mxu0 0.0
    %102 = vmatpush1.msra.mxu0 %v70
    %103 = vmatprep.subr.mxu0 0.0
    %104 = vmatpush1.msra.mxu0 0.0
    %105 = vmatprep.subr.mxu0 0.0
    %106 = vmatpush1.msra.mxu0 0.0
    %107 = vmatprep.subr.mxu0 0.0
    %108 = vmatpush1.msra.mxu0 0.0
    %109 = vmatprep.subr.mxu0 0.0
    %110 = vmatpush1.msra.mxu0 0.0
    %111 = vmatprep.subr.mxu0 0.0
    %112 = vmatpush1.msra.mxu0 0.0
    %113 = vmatprep.subr.mxu0 0.0
    %114 = vmatpush1.msra.mxu0 0.0
    %115 = vmatprep.subr.mxu0 0.0
    %116 = vmatpush1.msra.mxu0 0.0
    %117 = vmatprep.subr.mxu0 0.0
    %118 = vmatpush1.msra.mxu0 0.0
    %119 = vmatprep.subr.mxu0 0.0
    %120 = vmatpush1.msra.mxu0 0.0
    %121 = vmatprep.subr.mxu0 0.0
    %122 = vmatpush1.msra.mxu0 0.0
    %123 = vmatprep.subr.mxu0 0.0
    %124 = vmatpush1.msra.mxu0 0.0
    %125 = vmatprep.subr.mxu0 0.0
    %126 = vmatpush1.msra.mxu0 0.0
    %127 = vmatprep.subr.mxu0 0.0
    %128 = vmatpush1.msra.mxu0 0.0
    %129 = vmatprep.subr.mxu0 0.0
    %130 = vmatpush1.msra.mxu0 0.0
    %131 = vmatprep.subr.mxu0 0.0
    %132 = vmatpush1.msra.mxu0 0.0
    %133 = vmatprep.subr.mxu0 0.0
    %134 = vmatpush1.msra.mxu0 0.0
    %135 = vmatprep.mubr.f32.mxu0 0.0
    %136 = vmatmul.mubr.f32.gmra.mrb[0].mxu0 %v54
    %v137 = vpop.f32.mrb[0].mxu0
    %v138 = vadd.f32 0.0, %v137
    %v139 = vpop.f32.mrb[0].mxu0
    %140 = vdwg.mxu0
    %v141 = vadd.f32 %v53, %v138
    %142 = vst [vmem:[#allocation7] sm:$0xff] %v141
    // Predicated region
    $region26: #{tpu_custom_call.1} parent=1 // pred_check
      _
    $region27: #{tpu_custom_call.1} parent=1 // pred_check_branch
      %144 = sbr.rel (0) target = $region29
    $region28: #{tpu_custom_call.1} parent=1 // pred_region
      %s146 = ssub.s32 128, 128
      %147 = vsyncadd [#allocation4], %s146
      %s149 = sshll.u32 [#allocation7], 4
      %s150 = int_to_ptr.vmem [resolvable:$true] %s149
      %152 = dma.vmem_to_hbm [thread:$0]  %s150, 128, %s3, [#allocation4]
    $region29: #{tpu_custom_call.1} parent=1 // pred_fallthru
      _
    // Predicated region
    $region30: #{tpu_custom_call.1} parent=1 // pred_check
      _
    $region31: #{tpu_custom_call.1} parent=1 // pred_check_branch
      %154 = sbr.rel (0) target = $region33
    $region32: #{tpu_custom_call.1} parent=1 // pred_region
      %155 = dma.done [#allocation4], 128
    $region33: #{tpu_custom_call.1} parent=1 // pred_fallthru
      _
    %156 = vsyncpa [#allocation3], 1
    %157 = vsyncpa [#allocation6], 1
    %158 = vsyncpa [#allocation4], 1

</llo_original>
